<compile_context>
chip_gen: v7x
topology: tpu7x:2x2x1
jax: 0.10.0
libtpu: 0.0.40
codegen_flags: <defaults>
</compile_context>

<pallas_src>
import jax
import jax.numpy as jnp
from jax.experimental import pallas as pl
from jax.experimental.pallas import tpu as pltpu

_CHUNK_BYTES = 64 * 1024 * 1024  # target bytes per DMA chunk for huge inputs
_MAX_CHUNKS = 8                  # a handful of in-flight DMAs is plenty


def _chunk_plan(shape, dtype):
    """Static plan: (num_chunks, rows_per_chunk) along the leading axis.

    Only chunk when the leading axis is NOT one of the (8,128)-tiled trailing
    dims (ndim >= 3), so every chunk start sits on a layout-tile boundary.
    Otherwise a single whole-array DMA already runs at HBM roofline.
    """
    total_bytes = jnp.dtype(dtype).itemsize
    for d in shape:
        total_bytes *= d
    if len(shape) < 3 or shape[0] <= 1 or total_bytes <= _CHUNK_BYTES:
        return 1, (shape[0] if shape else 1)
    leading = shape[0]
    want = min(_MAX_CHUNKS, pl.cdiv(total_bytes, _CHUNK_BYTES), leading)
    rows = pl.cdiv(leading, want)
    return pl.cdiv(leading, rows), rows


def _make_identity_kernel(num_chunks, rows, leading):
    """Kernel: copy x -> o with direct HBM->HBM async DMAs (no VMEM staging)."""

    def kernel(x_hbm, o_hbm, sems):
        if num_chunks == 1:
            cp = pltpu.make_async_copy(x_hbm, o_hbm, sems.at[0])
            cp.start()
            cp.wait()
            return
        copies = []
        for c in range(num_chunks):  # static unroll — only a few chunks
            start = c * rows
            size = min(rows, leading - start)
            copies.append(
                pltpu.make_async_copy(
                    x_hbm.at[pl.ds(start, size)],
                    o_hbm.at[pl.ds(start, size)],
                    sems.at[c],
                )
            )
        for cp in copies:   # launch everything first ...
            cp.start()
        for cp in copies:   # ... then wait; a pure copy has nothing to overlap
            cp.wait()

    return kernel


def identity(x: jax.Array, *, donate: bool = False) -> jax.Array:
    """Pallas identity: returns an array equal to x (same shape, same dtype).

    donate=True: the caller's buffer already holds the answer, so we skip the
    kernel entirely (zero HBM traffic) instead of re-reading/re-writing 2N
    bytes through an aliased output.
    """
    if donate or x.size == 0:
        return x

    num_chunks, rows = _chunk_plan(x.shape, x.dtype)
    leading = x.shape[0] if x.ndim else 1

    return pl.pallas_call(
        _make_identity_kernel(num_chunks, rows, leading),
        out_shape=jax.ShapeDtypeStruct(x.shape, x.dtype),
        in_specs=[pl.BlockSpec(memory_space=pl.ANY)],   # raw HBM ref, no auto-DMA
        out_specs=pl.BlockSpec(memory_space=pl.ANY),    # raw HBM ref, no auto-DMA
        scratch_shapes=[pltpu.SemaphoreType.DMA((num_chunks,))],
    )(x)


if __name__ == "__main__":
    key = jax.random.PRNGKey(0)

    # Shape implied by typical NCHW use of the module: batch=2, channels=4, 16x16.
    x = jax.random.normal(key, (2, 4, 16, 16), dtype=jnp.float32)
    y = identity(x)
    jax.block_until_ready(y)
    assert y.shape == x.shape, (y.shape, x.shape)
    assert y.dtype == x.dtype, (y.dtype, x.dtype)
    assert bool(jnp.all(y == x)), "identity output mismatch"

    # Odd, non-128-aligned shape: previously hit the pad+slice fallback (3 extra
    # HBM passes); now handled natively by the HBM->HBM DMA with exactly N read
    # + N written bytes.
    x2 = jax.random.normal(jax.random.PRNGKey(0), (3, 5, 7), dtype=jnp.float32)
    y2 = identity(x2)
    jax.block_until_ready(y2)
    assert y2.shape == x2.shape and y2.dtype == x2.dtype
    assert bool(jnp.all(y2 == x2)), "identity (odd shape) output mismatch"

    # donate=True short-circuit: true identity, zero HBM traffic.
    y3 = identity(x, donate=True)
    assert y3 is x

    print("KERNEL_OK")
</pallas_src>

<mosaic_0001>
module attributes {stable_mosaic.version = 11 : i64} {
  func.func @kernel(%arg0: memref<2x4x16x16xf32, #tpu.memory_space<any>>, %arg1: memref<2x4x16x16xf32, #tpu.memory_space<any>>, %arg2: memref<1x!tpu.dma_semaphore, #tpu.memory_space<semaphore_mem>>) attributes {dimension_semantics = [], scalar_prefetch = 0 : i64, scratch_operands = 1 : i64, tpu.core_type = #tpu.core_type<tc>} {
    %c0_i32 = arith.constant 0 : i32
    %0 = tpu.memref_slice %arg2[%c0_i32] : memref<1x!tpu.dma_semaphore, #tpu.memory_space<semaphore_mem>> -> memref<1x!tpu.dma_semaphore, #tpu.memory_space<semaphore_mem>>
    %1 = tpu.memref_squeeze %0 : memref<1x!tpu.dma_semaphore, #tpu.memory_space<semaphore_mem>> -> memref<!tpu.dma_semaphore, #tpu.memory_space<semaphore_mem>>
    tpu.enqueue_dma source(%arg0 : memref<2x4x16x16xf32, #tpu.memory_space<any>>) target(%arg1 : memref<2x4x16x16xf32, #tpu.memory_space<any>>) target_semaphore(%1 : memref<!tpu.dma_semaphore, #tpu.memory_space<semaphore_mem>>)
    %c0_i32_0 = arith.constant 0 : i32
    %2 = tpu.memref_slice %arg2[%c0_i32_0] : memref<1x!tpu.dma_semaphore, #tpu.memory_space<semaphore_mem>> -> memref<1x!tpu.dma_semaphore, #tpu.memory_space<semaphore_mem>>
    %3 = tpu.memref_squeeze %2 : memref<1x!tpu.dma_semaphore, #tpu.memory_space<semaphore_mem>> -> memref<!tpu.dma_semaphore, #tpu.memory_space<semaphore_mem>>
    tpu.wait_dma2 semaphore(%3 : memref<!tpu.dma_semaphore, #tpu.memory_space<semaphore_mem>>) src(%arg0 : memref<2x4x16x16xf32, #tpu.memory_space<any>>) dst(%arg1 : memref<2x4x16x16xf32, #tpu.memory_space<any>>)
    return
  }
}

</mosaic_0001>

<llo_original>
// kernel: tpu_custom_call.1
$region0: #{tpu_custom_call.1}
  #allocation0 [shape = 'u32[]', space=smem, size = 0x4, offset = 0x4, fixed_abs, tag = 'smem constant byte address 0x4 - core index']
  #allocation1 [shape = 'u32[144,128]{1,0:T(1,128)}', space=vmem, size = 0x12000, scoped, tag = 'internal scratch']
  #allocation2 [shape = 's32[1]{0}', space=sflag, size = 0x4, scoped, tag = 'scratch operand']
  #allocation3 [shape = 's32[]', space=sflag, size = 0x4, offset = 0, fixed_abs, tag = 'sflag constant byte address 0x0 - dummy sync flag']
  #allocation4 [shape = 'u32[0]{0}', space=smem, size = 0, offset = 0, fixed_abs, tag = 'smem constant byte address 0x0 - null']
  %s0 = inlined_call_operand.hbm [shape: f32[2,4,16,16], index: 0, kind: input, shape index: {}]
  %s1 = inlined_call_operand.hbm [shape: f32[2,4,16,16], index: 1, kind: output, shape index: {}]
  %s2 = sld [smem:[#allocation0]]
  $region2: #{tpu_custom_call.1} parent=0
    _
  %s4 = ssub.s32 1, %s2
  %s5 = scalar_select 0, %s4, %s2
  %s7 = sshll.u32 1, 14
  %s8 = sxor.u32 4294967295, %s7
  %s11 = sshll.u32 3, 24
  %s12 = sxor.u32 4294967295, %s11
  %s13 = sand.u32 0, %s12
  %s15 = sor.u32 %s13, 0
  %18 = dma.general %s0, 2048, %s1, [#allocation2], [#allocation3], [#allocation4], %s15, 0
  %s19 = smul.u32 2, 4
  %s20 = smul.u32 %s19, 16
  %s21 = smul.u32 %s20, 1
  %s22 = sshll.u32 %s21, 4
  %23 = dma.done [#allocation2], %s22
  %24 = vsyncmov [#allocation2]
  %s25 = vpop.sfrf %24
  %p26 = scmp.eq.s32.totalorder %s25, 0
  %p27 = pneg %p26
  %29 = shalt.err (%p27)

</llo_original>
